<compile_context>
chip_gen: v7x
topology: tpu7x:2x2x1
jax: 0.10.0
libtpu: 0.0.40
codegen_flags: <defaults>
</compile_context>

<pallas_src>
import functools

import jax
import jax.numpy as jnp
import numpy as np
from jax.experimental import pallas as pl
from jax.experimental.pallas import tpu as pltpu


def _voxelize_kernel(stats_ref, feat_ref, coord_ref, vox_ref, norm_ref, acc_ref,
                     *, r, rx, r2p, c, n_valid, nt, mxu_dtype):
    """One (batch, point-tile) grid step.

    stats_ref : SMEM [B, 4]            (mean_x, mean_y, mean_z, inv_scale) per batch
    feat_ref  : VMEM [C, NT]           raw feature block (ragged tail may be garbage)
    coord_ref : VMEM [3, NT]           coords block (xyz on sublanes, points on lanes)
    vox_ref   : VMEM [C*rx, r2p]       output: per-channel, per-x rows, (y,z) lanes
    norm_ref  : VMEM [3, NT]           normalized coords output
    acc_ref   : VMEM [(C+1)*rx, r2p]   f32 accumulator, persistent across point tiles
    """
    b = pl.program_id(0)
    n = pl.program_id(1)

    @pl.when(n == 0)
    def _init():
        acc_ref[...] = jnp.zeros_like(acc_ref)

    # Per-batch normalization scalars (cheap reductions hoisted to a JAX pre-pass).
    mx = stats_ref[b, 0]
    my = stats_ref[b, 1]
    mz = stats_ref[b, 2]
    inv = stats_ref[b, 3]          # 1/(2*max_norm + eps)  or  0.5 if normalize=False
    rf = float(r)
    rmax = float(r - 1)

    # ---- vectorized normalization of the whole [3, NT] block ----
    co = coord_ref[...]                                               # [3, NT]
    axis_id = jax.lax.broadcasted_iota(jnp.int32, (3, 1), 0)
    mean_col = jnp.where(axis_id == 0, mx, jnp.where(axis_id == 1, my, mz))   # [3, 1]
    nc = jnp.clip(((co - mean_col) * inv + 0.5) * rf, 0.0, rmax)      # [3, NT]
    norm_ref[...] = nc.astype(norm_ref.dtype)

    # Voxel indices, derived from the normalized coords (single coordinate path).
    # NOTE: jnp.round is round-half-to-even, matching torch.round.
    vi = jnp.round(nc).astype(jnp.int32)                              # [3, NT]
    vx = vi[0:1, :]                                                   # [1, NT]
    flat_yz = vi[1:2, :] * r + vi[2:3, :]                             # [1, NT]

    # Ragged-tail mask: columns past the true point count contribute nothing to
    # either sums or counts (their lhs columns are zeroed below).
    col = n * nt + jax.lax.broadcasted_iota(jnp.int32, (1, nt), 1)
    valid = col < n_valid                                             # [1, NT] bool

    feats = jnp.where(valid, feat_ref[...], 0.0)                      # [C, NT]
    ones = valid.astype(jnp.float32)                                  # [1, NT] counts row

    # ---- separable one-hot ----
    #   acc[(ch, x), y*r+z] += sum_n lhs[(ch, x), n] * [flat_yz[n] == y*r+z]
    x_iota = jax.lax.broadcasted_iota(jnp.int32, (rx, 1), 0)          # [rx, 1]
    ox = (x_iota == vx).astype(jnp.float32)                           # [rx, NT]
    rows = [feats[ch:ch + 1, :] * ox for ch in range(c)]              # C x [rx, NT]
    rows.append(ones * ox)                                            # counts block
    lhs = jnp.concatenate(rows, axis=0)                               # [(C+1)*rx, NT]

    yz_iota = jax.lax.broadcasted_iota(jnp.int32, (r2p, 1), 0)        # [r2p, 1]
    oyz_t = (yz_iota == flat_yz).astype(mxu_dtype)                    # [r2p, NT]

    # Contract the point (lane) axis of both operands: the native transposed-rhs
    # MXU pattern (same as q @ k^T in flash attention); f32 accumulation.
    acc_ref[...] += jax.lax.dot_general(
        lhs.astype(mxu_dtype), oyz_t,
        dimension_numbers=(((1,), (1,)), ((), ())),
        preferred_element_type=jnp.float32)                           # [(C+1)*rx, r2p]

    # ---- finalize: exact masked mean (runs once per batch) ----
    @pl.when(n == pl.num_programs(1) - 1)
    def _finalize():
        acc = acc_ref[...]
        sums = acc[0:c * rx, :]                                       # [C*rx, r2p]
        counts = acc[c * rx:(c + 1) * rx, :]                          # [rx, r2p]
        # Exact divide: where counts == 0 the sums are exactly 0, so 0/1 = 0 and no
        # extra select is needed.
        invc = 1.0 / jnp.maximum(counts, 1.0)
        invc_full = jnp.concatenate([invc] * c, axis=0)               # [C*rx, r2p]
        vox_ref[...] = (sums * invc_full).astype(vox_ref.dtype)


def voxelization(features, coords, resolution, normalize=True, eps=0.0,
                 n_tile=None, mxu_dtype=jnp.float32):
    """Pallas implementation of Voxelization.forward.

    features: [B, C, N] f32, coords: [B, 3, N] f32.
    Returns (voxel_grid [B, C, R, R, R], norm_coords [B, 3, N]).
    """
    B, C, N = features.shape
    assert coords.shape == (B, 3, N)
    r = int(resolution)
    rx = ((r + 7) // 8) * 8                 # x rows, padded to the sublane tile
    r2p = ((r * r + 127) // 128) * 128      # (y,z) lanes, padded to the lane tile

    features = features.astype(jnp.float32)
    coords = coords.astype(jnp.float32)

    # ---- cheap per-batch reductions (pure-JAX pre-pass; unblocks N tiling) ----
    mean = coords.mean(axis=2)                                            # [B, 3]
    if normalize:
        centered = coords - mean[:, :, None]
        m = jnp.sqrt(jnp.sum(centered * centered, axis=1)).max(axis=1)    # [B]
        # Guard the degenerate all-points-at-centroid case (reference would NaN).
        inv = 1.0 / jnp.maximum(m * 2.0 + float(eps), 1e-12)
    else:
        inv = jnp.full((B,), 0.5, dtype=jnp.float32)
    stats = jnp.concatenate([mean, inv[:, None]], axis=1).astype(jnp.float32)  # [B, 4]

    # ---- generation-aware VMEM budget & point-tile size ----
    try:
        vmem_cap = int(pltpu.get_tpu_info().vmem_capacity_bytes)
    except Exception:
        vmem_cap = 64 * 1024 * 1024          # conservative (v7x per-core VMEM)
    vmem_limit = max(32 << 20, min(int(vmem_cap * 0.6), 100 << 20))

    if n_tile is None:
        cp1 = C + 1
        # Resident bytes: accumulator + (double-buffered) output block.
        fixed = 4 * (cp1 * rx * r2p + 2 * C * rx * r2p)
        # Per-point bytes: double-buffered inputs/outputs + lhs/one-hot intermediates.
        per_pt = 4 * (2 * max(C, 8) + 4 * 8 + cp1 * rx + rx + r2p + 32)
        budget = vmem_limit // 2
        nt = max(128, ((budget - fixed) // max(per_pt, 1)) // 128 * 128)
        nt_cap = 8192 if vmem_cap >= (96 << 20) else 4096
        nt = min(nt, nt_cap, max(128, ((N + 127) // 128) * 128))
    else:
        nt = int(n_tile)
    assert nt % 128 == 0, "point tile must be a multiple of 128 lanes"
    n_tiles = (N + nt - 1) // nt             # ragged tail is masked in-kernel

    kernel = functools.partial(_voxelize_kernel, r=r, rx=rx, r2p=r2p, c=C,
                               n_valid=N, nt=nt, mxu_dtype=mxu_dtype)

    vox_flat, norm_coords = pl.pallas_call(
        kernel,
        grid=(B, n_tiles),
        in_specs=[
            pl.BlockSpec(memory_space=pltpu.MemorySpace.SMEM),            # stats [B, 4]
            pl.BlockSpec((None, C, nt), lambda b, n: (b, 0, n)),          # features [C, NT]
            pl.BlockSpec((None, 3, nt), lambda b, n: (b, 0, n)),          # coords [3, NT]
        ],
        out_specs=[
            pl.BlockSpec((None, C * rx, r2p), lambda b, n: (b, 0, 0)),    # voxel sums/means
            pl.BlockSpec((None, 3, nt), lambda b, n: (b, 0, n)),          # norm_coords
        ],
        out_shape=(
            jax.ShapeDtypeStruct((B, C * rx, r2p), jnp.float32),
            jax.ShapeDtypeStruct((B, 3, N), jnp.float32),
        ),
        scratch_shapes=[pltpu.VMEM(((C + 1) * rx, r2p), jnp.float32)],    # accumulator
        compiler_params=pltpu.CompilerParams(
            dimension_semantics=("parallel", "arbitrary"),
            vmem_limit_bytes=vmem_limit),
    )(stats, features, coords)

    # Cheap host-side slice of the sublane/lane padding + reshape to the dense grid.
    vox = vox_flat.reshape(B, C, rx, r2p)[:, :, :r, :r * r].reshape(B, C, r, r, r)
    return vox, norm_coords


def _ref_voxelization(features, coords, resolution, normalize=True, eps=0.0):
    """Pure-JAX reference mirroring the PyTorch module + F.avg_voxelize (exact f32)."""
    r = int(resolution)
    r3 = r ** 3
    B, C, N = features.shape
    nc = coords - coords.mean(axis=2, keepdims=True)
    if normalize:
        norms = jnp.sqrt(jnp.sum(nc * nc, axis=1, keepdims=True))          # [B,1,N]
        m = jnp.max(norms, axis=2, keepdims=True)                          # [B,1,1]
        nc = nc / (m * 2.0 + eps) + 0.5
    else:
        nc = (nc + 1.0) / 2.0
    nc = jnp.clip(nc * r, 0, r - 1)
    vox = jnp.round(nc).astype(jnp.int32)
    flat = vox[:, 0] * r * r + vox[:, 1] * r + vox[:, 2]                   # [B, N]
    onehot = jax.nn.one_hot(flat, r3, dtype=jnp.float32)                   # [B, N, R3]
    sums = jnp.einsum('bcn,bnv->bcv', features, onehot,
                      precision=jax.lax.Precision.HIGHEST)
    counts = onehot.sum(axis=1, keepdims=True)                             # [B, 1, R3]
    avg = jnp.where(counts > 0, sums / jnp.maximum(counts, 1.0), 0.0)
    return avg.reshape(B, C, r, r, r), nc


if __name__ == "__main__":
    key = jax.random.PRNGKey(0)
    k1, k2 = jax.random.split(key)

    B, C, N = 2, 4, 500          # N not a tile multiple: exercises the ragged-tail mask
    resolution = 8

    features = jax.random.normal(k1, (B, C, N), dtype=jnp.float32)
    coords = jax.random.uniform(k2, (B, 3, N), dtype=jnp.float32,
                                minval=-1.0, maxval=1.0)

    # n_tile=256 -> 2 point tiles per batch: exercises the persistent accumulator path.
    vox, norm_coords = voxelization(features, coords, resolution,
                                    normalize=True, eps=0.0, n_tile=256)
    jax.block_until_ready((vox, norm_coords))

    vox_ref, norm_ref = _ref_voxelization(features, coords, resolution,
                                          normalize=True, eps=0.0)
    np.testing.assert_allclose(np.asarray(norm_coords), np.asarray(norm_ref),
                               rtol=1e-5, atol=1e-5)
    # f32 matmul + exact divide in the finalize -> tight tolerance (vs. 2e-2 previously).
    np.testing.assert_allclose(np.asarray(vox), np.asarray(vox_ref),
                               rtol=1e-4, atol=1e-4)

    print("KERNEL_OK")
</pallas_src>

<mosaic_0001>
module attributes {stable_mosaic.version = 11 : i64} {
  func.func @_voxelize_kernel(%arg0: i32, %arg1: i32, %arg2: memref<2x4xf32, #tpu.memory_space<smem>>, %arg3: memref<1x4x256xf32, #tpu.memory_space<vmem>>, %arg4: memref<1x3x256xf32, #tpu.memory_space<vmem>>, %arg5: memref<1x32x128xf32, #tpu.memory_space<vmem>>, %arg6: memref<1x3x256xf32, #tpu.memory_space<vmem>>, %arg7: memref<40x128xf32, #tpu.memory_space<vmem>>) attributes {dimension_semantics = [#tpu.dimension_semantics<parallel>, #tpu.dimension_semantics<arbitrary>], iteration_bounds = array<i64: 2, 2>, scalar_prefetch = 0 : i64, scratch_operands = 1 : i64, tpu.core_type = #tpu.core_type<tc>, window_params = [{transform_indices = @transform_0, window_bounds = array<i64: 2, 4>}, {transform_indices = @transform_1, window_bounds = array<i64: 1, 4, 256>}, {transform_indices = @transform_2, window_bounds = array<i64: 1, 3, 256>}, {transform_indices = @transform_3, window_bounds = array<i64: 1, 32, 128>}, {transform_indices = @transform_4, window_bounds = array<i64: 1, 3, 256>}]} {
    %c0_i32 = arith.constant 0 : i32
    %0 = arith.cmpi eq, %arg1, %c0_i32 : i32
    %1 = arith.extui %0 : i1 to i32
    %c0_i32_0 = arith.constant 0 : i32
    %2 = arith.cmpi ne, %1, %c0_i32_0 : i32
    scf.if %2 {
      %cst_22 = arith.constant 0.000000e+00 : f32
      %94 = vector.broadcast %cst_22 : f32 to vector<40x128xf32>
      %c0_23 = arith.constant 0 : index
      %c0_24 = arith.constant 0 : index
      %95 = vector.load %arg7[%c0_23, %c0_24] : memref<40x128xf32, #tpu.memory_space<vmem>>, vector<40x128xf32>
      tpu.vector_store %arg7[%c0_23, %c0_24], %94 {strides = array<i32>} : memref<40x128xf32, #tpu.memory_space<vmem>>, vector<40x128xf32>,
    } else {
    }
    %3 = arith.index_cast %arg0 : i32 to index
    %c0 = arith.constant 0 : index
    %4 = memref.load %arg2[%3, %c0] : memref<2x4xf32, #tpu.memory_space<smem>>
    %5 = arith.index_cast %arg0 : i32 to index
    %c1 = arith.constant 1 : index
    %6 = memref.load %arg2[%5, %c1] : memref<2x4xf32, #tpu.memory_space<smem>>
    %7 = arith.index_cast %arg0 : i32 to index
    %c2 = arith.constant 2 : index
    %8 = memref.load %arg2[%7, %c2] : memref<2x4xf32, #tpu.memory_space<smem>>
    %9 = arith.index_cast %arg0 : i32 to index
    %c3 = arith.constant 3 : index
    %10 = memref.load %arg2[%9, %c3] : memref<2x4xf32, #tpu.memory_space<smem>>
    %c0_1 = arith.constant 0 : index
    %c0_2 = arith.constant 0 : index
    %c0_3 = arith.constant 0 : index
    %11 = vector.load %arg4[%c0_1, %c0_2, %c0_3] : memref<1x3x256xf32, #tpu.memory_space<vmem>>, vector<1x3x256xf32>
    %12 = vector.shape_cast %11 : vector<1x3x256xf32> to vector<3x256xf32>
    %13 = tpu.iota {dimensions = array<i32: 0>} : vector<3x1xi32>
    %c0_i32_4 = arith.constant 0 : i32
    %14 = vector.broadcast %c0_i32_4 : i32 to vector<3x1xi32>
    %15 = arith.cmpi eq, %13, %14 : vector<3x1xi32>
    %c1_i32 = arith.constant 1 : i32
    %16 = vector.broadcast %c1_i32 : i32 to vector<3x1xi32>
    %17 = arith.cmpi eq, %13, %16 : vector<3x1xi32>
    %18 = vector.broadcast %6 : f32 to vector<3x1xf32>
    %19 = vector.broadcast %8 : f32 to vector<3x1xf32>
    %20 = arith.select %17, %18, %19 : vector<3x1xi1>, vector<3x1xf32>
    %21 = vector.broadcast %4 : f32 to vector<3x1xf32>
    %22 = arith.select %15, %21, %20 : vector<3x1xi1>, vector<3x1xf32>
    %23 = vector.broadcast %22 : vector<3x1xf32> to vector<3x256xf32>
    %24 = arith.subf %12, %23 : vector<3x256xf32>
    %25 = vector.broadcast %10 : f32 to vector<3x256xf32>
    %26 = arith.mulf %24, %25 : vector<3x256xf32>
    %cst = arith.constant 5.000000e-01 : f32
    %27 = vector.broadcast %cst : f32 to vector<3x256xf32>
    %28 = arith.addf %26, %27 : vector<3x256xf32>
    %cst_5 = arith.constant 8.000000e+00 : f32
    %29 = vector.broadcast %cst_5 : f32 to vector<3x256xf32>
    %30 = arith.mulf %28, %29 : vector<3x256xf32>
    %cst_6 = arith.constant 0.000000e+00 : f32
    %cst_7 = arith.constant 7.000000e+00 : f32
    %31 = vector.broadcast %cst_6 : f32 to vector<3x256xf32>
    %32 = arith.maximumf %31, %30 : vector<3x256xf32>
    %33 = vector.broadcast %cst_7 : f32 to vector<3x256xf32>
    %34 = arith.minimumf %33, %32 : vector<3x256xf32>
    %c0_8 = arith.constant 0 : index
    %c0_9 = arith.constant 0 : index
    %c0_10 = arith.constant 0 : index
    %35 = vector.load %arg6[%c0_8, %c0_9, %c0_10] : memref<1x3x256xf32, #tpu.memory_space<vmem>>, vector<1x3x256xf32>
    %36 = vector.shape_cast %35 : vector<1x3x256xf32> to vector<3x256xf32>
    %37 = vector.shape_cast %34 : vector<3x256xf32> to vector<1x3x256xf32>
    tpu.vector_store %arg6[%c0_8, %c0_9, %c0_10], %37 {strides = array<i32>} : memref<1x3x256xf32, #tpu.memory_space<vmem>>, vector<1x3x256xf32>,
    %38 = math.roundeven %34 : vector<3x256xf32>
    %39 = arith.fptosi %38 : vector<3x256xf32> to vector<3x256xi32>
    %40 = vector.extract_strided_slice %39 {offsets = [0, 0], sizes = [1, 256], strides = [1, 1]} : vector<3x256xi32> to vector<1x256xi32>
    %41 = vector.extract_strided_slice %39 {offsets = [1, 0], sizes = [1, 256], strides = [1, 1]} : vector<3x256xi32> to vector<1x256xi32>
    %c8_i32 = arith.constant 8 : i32
    %42 = vector.broadcast %c8_i32 : i32 to vector<1x256xi32>
    %43 = arith.muli %41, %42 : vector<1x256xi32>
    %44 = vector.extract_strided_slice %39 {offsets = [2, 0], sizes = [1, 256], strides = [1, 1]} : vector<3x256xi32> to vector<1x256xi32>
    %45 = arith.addi %43, %44 : vector<1x256xi32>
    %c256_i32 = arith.constant 256 : i32
    %46 = arith.muli %arg1, %c256_i32 : i32
    %47 = tpu.iota {dimensions = array<i32: 1>} : vector<1x256xi32>
    %48 = vector.broadcast %46 : i32 to vector<1x256xi32>
    %49 = arith.addi %48, %47 : vector<1x256xi32>
    %c500_i32 = arith.constant 500 : i32
    %50 = vector.broadcast %c500_i32 : i32 to vector<1x256xi32>
    %51 = arith.cmpi slt, %49, %50 : vector<1x256xi32>
    %c0_11 = arith.constant 0 : index
    %c0_12 = arith.constant 0 : index
    %c0_13 = arith.constant 0 : index
    %52 = vector.load %arg3[%c0_11, %c0_12, %c0_13] : memref<1x4x256xf32, #tpu.memory_space<vmem>>, vector<1x4x256xf32>
    %53 = vector.shape_cast %52 : vector<1x4x256xf32> to vector<4x256xf32>
    %cst_14 = arith.constant 0.000000e+00 : f32
    %54 = vector.shape_cast %51 : vector<1x256xi1> to vector<1x256xi1>
    %55 = vector.broadcast %54 : vector<1x256xi1> to vector<4x256xi1>
    %56 = vector.broadcast %cst_14 : f32 to vector<4x256xf32>
    %57 = arith.select %55, %53, %56 : vector<4x256xi1>, vector<4x256xf32>
    %58 = arith.extui %51 : vector<1x256xi1> to vector<1x256xi32>
    %59 = arith.sitofp %58 : vector<1x256xi32> to vector<1x256xf32>
    %60 = tpu.iota {dimensions = array<i32: 0>} : vector<8x1xi32>
    %61 = vector.broadcast %60 : vector<8x1xi32> to vector<8x256xi32>
    %62 = vector.broadcast %40 : vector<1x256xi32> to vector<8x256xi32>
    %63 = arith.cmpi eq, %61, %62 : vector<8x256xi32>
    %64 = arith.extui %63 : vector<8x256xi1> to vector<8x256xi32>
    %65 = arith.sitofp %64 : vector<8x256xi32> to vector<8x256xf32>
    %66 = vector.extract_strided_slice %57 {offsets = [0, 0], sizes = [1, 256], strides = [1, 1]} : vector<4x256xf32> to vector<1x256xf32>
    %67 = vector.broadcast %66 : vector<1x256xf32> to vector<8x256xf32>
    %68 = arith.mulf %67, %65 : vector<8x256xf32>
    %69 = vector.extract_strided_slice %57 {offsets = [1, 0], sizes = [1, 256], strides = [1, 1]} : vector<4x256xf32> to vector<1x256xf32>
    %70 = vector.broadcast %69 : vector<1x256xf32> to vector<8x256xf32>
    %71 = arith.mulf %70, %65 : vector<8x256xf32>
    %72 = vector.extract_strided_slice %57 {offsets = [2, 0], sizes = [1, 256], strides = [1, 1]} : vector<4x256xf32> to vector<1x256xf32>
    %73 = vector.broadcast %72 : vector<1x256xf32> to vector<8x256xf32>
    %74 = arith.mulf %73, %65 : vector<8x256xf32>
    %75 = vector.extract_strided_slice %57 {offsets = [3, 0], sizes = [1, 256], strides = [1, 1]} : vector<4x256xf32> to vector<1x256xf32>
    %76 = vector.broadcast %75 : vector<1x256xf32> to vector<8x256xf32>
    %77 = arith.mulf %76, %65 : vector<8x256xf32>
    %78 = vector.broadcast %59 : vector<1x256xf32> to vector<8x256xf32>
    %79 = arith.mulf %78, %65 : vector<8x256xf32>
    %80 = tpu.concatenate %68, %71, %74, %77, %79 in 0 : vector<8x256xf32>, vector<8x256xf32>, vector<8x256xf32>, vector<8x256xf32>, vector<8x256xf32> -> vector<40x256xf32>
    %81 = tpu.iota {dimensions = array<i32: 0>} : vector<128x1xi32>
    %82 = vector.broadcast %81 : vector<128x1xi32> to vector<128x256xi32>
    %83 = vector.broadcast %45 : vector<1x256xi32> to vector<128x256xi32>
    %84 = arith.cmpi eq, %82, %83 : vector<128x256xi32>
    %85 = arith.extui %84 : vector<128x256xi1> to vector<128x256xi32>
    %86 = arith.sitofp %85 : vector<128x256xi32> to vector<128x256xf32>
    %c0_15 = arith.constant 0 : index
    %c0_16 = arith.constant 0 : index
    %87 = vector.load %arg7[%c0_15, %c0_16] : memref<40x128xf32, #tpu.memory_space<vmem>>, vector<40x128xf32>
    %cst_17 = arith.constant dense<0.000000e+00> : vector<40x128xf32>
    %88 = tpu.matmul %80, %86, %cst_17 {dimension_numbers = #tpu.dot_dimension_numbers<[1], [1], [0], [0], [0, 0, 1, 0], [], []>} : vector<40x256xf32>, vector<128x256xf32>, vector<40x128xf32> -> vector<40x128xf32>
    %89 = arith.addf %87, %88 : vector<40x128xf32>
    %c0_18 = arith.constant 0 : index
    %c0_19 = arith.constant 0 : index
    %90 = vector.load %arg7[%c0_18, %c0_19] : memref<40x128xf32, #tpu.memory_space<vmem>>, vector<40x128xf32>
    tpu.vector_store %arg7[%c0_18, %c0_19], %89 {strides = array<i32>} : memref<40x128xf32, #tpu.memory_space<vmem>>, vector<40x128xf32>,
    %c1_i32_20 = arith.constant 1 : i32
    %91 = arith.cmpi eq, %arg1, %c1_i32_20 : i32
    %92 = arith.extui %91 : i1 to i32
    %c0_i32_21 = arith.constant 0 : i32
    %93 = arith.cmpi ne, %92, %c0_i32_21 : i32
    scf.if %93 {
      %c0_22 = arith.constant 0 : index
      %c0_23 = arith.constant 0 : index
      %94 = vector.load %arg7[%c0_22, %c0_23] : memref<40x128xf32, #tpu.memory_space<vmem>>, vector<40x128xf32>
      %95 = vector.extract_strided_slice %94 {offsets = [0, 0], sizes = [32, 128], strides = [1, 1]} : vector<40x128xf32> to vector<32x128xf32>
      %96 = vector.extract_strided_slice %94 {offsets = [32, 0], sizes = [8, 128], strides = [1, 1]} : vector<40x128xf32> to vector<8x128xf32>
      %cst_24 = arith.constant 1.000000e+00 : f32
      %97 = vector.broadcast %cst_24 : f32 to vector<8x128xf32>
      %98 = arith.maximumf %96, %97 : vector<8x128xf32>
      %cst_25 = arith.constant 1.000000e+00 : f32
      %99 = vector.broadcast %cst_25 : f32 to vector<8x128xf32>
      %100 = arith.divf %99, %98 : vector<8x128xf32>
      %101 = tpu.concatenate %100, %100, %100, %100 in 0 : vector<8x128xf32>, vector<8x128xf32>, vector<8x128xf32>, vector<8x128xf32> -> vector<32x128xf32>
      %102 = arith.mulf %95, %101 : vector<32x128xf32>
      %c0_26 = arith.constant 0 : index
      %c0_27 = arith.constant 0 : index
      %c0_28 = arith.constant 0 : index
      %103 = vector.load %arg5[%c0_26, %c0_27, %c0_28] : memref<1x32x128xf32, #tpu.memory_space<vmem>>, vector<1x32x128xf32>
      %104 = vector.shape_cast %103 : vector<1x32x128xf32> to vector<32x128xf32>
      %105 = vector.shape_cast %102 : vector<32x128xf32> to vector<1x32x128xf32>
      tpu.vector_store %arg5[%c0_26, %c0_27, %c0_28], %105 {strides = array<i32>} : memref<1x32x128xf32, #tpu.memory_space<vmem>>, vector<1x32x128xf32>,
    } else {
    }
    return
  }
  func.func @transform_0(%arg0: i32, %arg1: i32) -> (i32, i32) {
    %c0_i32 = arith.constant 0 : i32
    %c0_i32_0 = arith.constant 0 : i32
    %c0_i32_1 = arith.constant 0 : i32
    return %c0_i32, %c0_i32_0 : i32, i32
  }
  func.func @transform_1(%arg0: i32, %arg1: i32) -> (i32, i32, i32) {
    %c0_i32 = arith.constant 0 : i32
    %c0_i32_0 = arith.constant 0 : i32
    return %arg0, %c0_i32, %arg1 : i32, i32, i32
  }
  func.func @transform_2(%arg0: i32, %arg1: i32) -> (i32, i32, i32) {
    %c0_i32 = arith.constant 0 : i32
    %c0_i32_0 = arith.constant 0 : i32
    return %arg0, %c0_i32, %arg1 : i32, i32, i32
  }
  func.func @transform_3(%arg0: i32, %arg1: i32) -> (i32, i32, i32) {
    %c0_i32 = arith.constant 0 : i32
    %c0_i32_0 = arith.constant 0 : i32
    %c0_i32_1 = arith.constant 0 : i32
    return %arg0, %c0_i32, %c0_i32_0 : i32, i32, i32
  }
  func.func @transform_4(%arg0: i32, %arg1: i32) -> (i32, i32, i32) {
    %c0_i32 = arith.constant 0 : i32
    %c0_i32_0 = arith.constant 0 : i32
    return %arg0, %c0_i32, %arg1 : i32, i32, i32
  }
}

</mosaic_0001>

<llo_original>
// kernel: tpu_custom_call.1
$region0: #{tpu_custom_call.1}
  #allocation0 [shape = 'u32[]', space=smem, size = 0x4, offset = 0x4, fixed_abs, tag = 'smem constant byte address 0x4 - core index']
  #allocation1 [shape = 'u32[144,128]{1,0:T(1,128)}', space=vmem, size = 0x12000, scoped, tag = 'internal scratch']
  #allocation2 [shape = 'f32[40,128]{1,0:T(8,128)}', space=vmem, size = 0x5000, scoped, tag = 'scratch operand']
  %s0 = inlined_call_operand.vmem [shape: f32[2,4], index: 0, kind: input, shape index: {}]
  %s1 = inlined_call_operand.vmem [shape: f32[2,4,500], index: 1, kind: input, shape index: {}]
  %s2 = inlined_call_operand.vmem [shape: f32[2,3,500], index: 2, kind: input, shape index: {}]
  %s3 = inlined_call_operand.hbm [shape: f32[2,32,128], index: 3, kind: output, shape index: {0}]
  %s4 = inlined_call_operand.vmem [shape: f32[2,3,500], index: 4, kind: output, shape index: {1}]
  %5 = xla_tuple %s3, %s4
  %s6 = sld [smem:[#allocation0]]
  $region65: #{tpu_custom_call.1} parent=0
    _
  %s8 = ssub.s32 1, %s6
  %s9 = scalar_select 0, %s8, %s6
  $region1: #{tpu_custom_call.1} parent=0
    #allocation3 [shape = 'u8[1024]{0}', space=smem, size = 0x400, scoped, tag = 'input window, operand 0, single buffered']
    #allocation4 [shape = 's32[2]{0}', space=sflag, size = 0x8, scoped, tag = 'scoped memory for tpu_custom_call.1']
    #allocation5 [shape = 's32[2]{0}', space=sflag, size = 0x8, scoped, tag = 'scoped memory for tpu_custom_call.1']
    #allocation6 [shape = 'u8[32768]{0}', space=vmem, size = 0x8000, scoped, tag = 'output window, operand 0']
    %10 = vsyncpa [#allocation5], 0
    %11 = vsyncpa [#allocation4], 0
    %s12 = scalar_lea.sflag [#allocation4], 1
    %13 = vsyncpa %s12, 0
    loop: start=0, step=1, limit=6
    $region2: #{tpu_custom_call.1} parent=1 // loop_pre_header
      _
    $region3: #{tpu_custom_call.1} parent=1 // loop_header
      %s15 = sphi 0, %s19
      %p16 = scmp.ge.s32.totalorder %s15, 6
      %s22 = sphi 0, %s34
      %s23 = sphi 0, %s30
      %s24 = sphi 0, %s22
      %s25 = sphi 0, %s23
      %s26 = sphi 0, %s24
      %s27 = sphi 0, %s25
      %s35 = sphi 0, %s35
      %s37 = sphi 0, %s35
      %s38 = sphi 0, %s37
      %s52 = sphi 0, %s38
      %s60 = sphi 0, %s62
      %s63 = sphi 0, %s60
      %s64 = sphi 0, %s63
      %s80 = sphi 0, %s64
      %s88 = sphi 0, %s90
      %s91 = sphi 0, %s88
      %s92 = sphi 0, %s91
      %s108 = sphi 0, %s92
      %s114 = sphi 0, %s116
      %s117 = sphi 0, %s114
      %s118 = sphi 0, %s117
      %s134 = sphi 0, %s118
      %s142 = sphi 0, %s144
      %s145 = sphi 0, %s142
      %s146 = sphi 0, %s145
      %s162 = sphi 0, %s146
    $region4: #{tpu_custom_call.1} parent=1 // loop_header_branch
      %18 = sbr.rel (%p16) target = $region8
    $region5: #{tpu_custom_call.1} parent=1 // loop_body
      %s20 = ssub.s32 %s15, 1
      %s21 = ssub.s32 %s15, 2
      %s28 = sadd.s32 1, %s23
      %p29 = scmp.ge.s32.totalorder %s28, 2
      %s30 = scalar_select %p29, 0, %s28
      %s31 = sadd.s32 1, %s22
      %s32 = scalar_select %p29, %s31, %s22
      %p33 = scmp.ge.s32.totalorder %s32, 2
      %s34 = scalar_select %p33, 0, %s32
      %s36 = sadd.s32 %s35, 1
      %p39 = scmp.eq.s32.totalorder %s15, 3
      %p40 = scmp.ne.s32.totalorder %s35, %s37
      %p41 = scmp.eq.s32.totalorder %s15, 0
      %p42 = por %p40, %p41
      %p43 = scmp.ne.s32.totalorder %s35, %s37
      %p44 = scmp.eq.s32.totalorder %s20, 3
      %p45 = por %p43, %p44
      %p46 = scmp.ne.s32.totalorder %s37, %s38
      %p47 = scmp.eq.s32.totalorder %s20, 0
      %p48 = por %p46, %p47
      %p49 = scmp.ne.s32.totalorder %s37, %s38
      %p50 = scmp.eq.s32.totalorder %s21, 3
      %p51 = por %p49, %p50
      %p53 = scmp.ne.s32.totalorder %s38, %s52
      %p54 = scmp.eq.s32.totalorder %s21, 0
      %p55 = por %p53, %p54
      %s56 = ssub.s32 %s22, %s34
      %s57 = ssub.s32 %s23, %s30
      %s58 = sor.u32 %s56, %s57
      %p59 = scmp.eq.s32.totalorder %s58, 0
      %s61 = sadd.s32 %s60, 1
      %s62 = scalar_select %p59, %s60, %s61
      %p65 = pneg %p59
      %p66 = scmp.eq.s32.totalorder %s15, 3
      %p67 = por %p65, %p66
      %p68 = scmp.ne.s32.totalorder %s60, %s63
      %p69 = scmp.eq.s32.totalorder %s15, 0
      %p70 = por %p68, %p69
      %p71 = scmp.ne.s32.totalorder %s60, %s63
      %p72 = scmp.eq.s32.totalorder %s20, 3
      %p73 = por %p71, %p72
      %p74 = scmp.ne.s32.totalorder %s63, %s64
      %p75 = scmp.eq.s32.totalorder %s20, 0
      %p76 = por %p74, %p75
      %p77 = scmp.ne.s32.totalorder %s63, %s64
      %p78 = scmp.eq.s32.totalorder %s21, 3
      %p79 = por %p77, %p78
      %p81 = scmp.ne.s32.totalorder %s64, %s80
      %p82 = scmp.eq.s32.totalorder %s21, 0
      %p83 = por %p81, %p82
      %s84 = ssub.s32 %s22, %s34
      %s85 = ssub.s32 %s23, %s30
      %s86 = sor.u32 %s84, %s85
      %p87 = scmp.eq.s32.totalorder %s86, 0
      %s89 = sadd.s32 %s88, 1
      %s90 = scalar_select %p87, %s88, %s89
      %p93 = pneg %p87
      %p94 = scmp.eq.s32.totalorder %s15, 3
      %p95 = por %p93, %p94
      %p96 = scmp.ne.s32.totalorder %s88, %s91
      %p97 = scmp.eq.s32.totalorder %s15, 0
      %p98 = por %p96, %p97
      %p99 = scmp.ne.s32.totalorder %s88, %s91
      %p100 = scmp.eq.s32.totalorder %s20, 3
      %p101 = por %p99, %p100
      %p102 = scmp.ne.s32.totalorder %s91, %s92
      %p103 = scmp.eq.s32.totalorder %s20, 0
      %p104 = por %p102, %p103
      %p105 = scmp.ne.s32.totalorder %s91, %s92
      %p106 = scmp.eq.s32.totalorder %s21, 3
      %p107 = por %p105, %p106
      %p109 = scmp.ne.s32.totalorder %s92, %s108
      %p110 = scmp.eq.s32.totalorder %s21, 0
      %p111 = por %p109, %p110
      %s112 = ssub.s32 %s22, %s34
      %p113 = scmp.eq.s32.totalorder %s112, 0
      %s115 = sadd.s32 %s114, 1
      %s116 = scalar_select %p113, %s114, %s115
      %p119 = pneg %p113
      %p120 = scmp.eq.s32.totalorder %s15, 3
      %p121 = por %p119, %p120
      %p122 = scmp.ne.s32.totalorder %s114, %s117
      %p123 = scmp.eq.s32.totalorder %s15, 0
      %p124 = por %p122, %p123
      %p125 = scmp.ne.s32.totalorder %s114, %s117
      %p126 = scmp.eq.s32.totalorder %s20, 3
      %p127 = por %p125, %p126
      %p128 = scmp.ne.s32.totalorder %s117, %s118
      %p129 = scmp.eq.s32.totalorder %s20, 0
      %p130 = por %p128, %p129
      %p131 = scmp.ne.s32.totalorder %s117, %s118
      %p132 = scmp.eq.s32.totalorder %s21, 3
      %p133 = por %p131, %p132
      %p135 = scmp.ne.s32.totalorder %s118, %s134
      %p136 = scmp.eq.s32.totalorder %s21, 0
      %p137 = por %p135, %p136
      %s138 = ssub.s32 %s22, %s34
      %s139 = ssub.s32 %s23, %s30
      %s140 = sor.u32 %s138, %s139
      %p141 = scmp.eq.s32.totalorder %s140, 0
      %s143 = sadd.s32 %s142, 1
      %s144 = scalar_select %p141, %s142, %s143
      %p147 = pneg %p141
      %p148 = scmp.eq.s32.totalorder %s15, 3
      %p149 = por %p147, %p148
      %p150 = scmp.ne.s32.totalorder %s142, %s145
      %p151 = scmp.eq.s32.totalorder %s15, 0
      %p152 = por %p150, %p151
      %p153 = scmp.ne.s32.totalorder %s142, %s145
      %p154 = scmp.eq.s32.totalorder %s20, 3
      %p155 = por %p153, %p154
      %p156 = scmp.ne.s32.totalorder %s145, %s146
      %p157 = scmp.eq.s32.totalorder %s20, 0
      %p158 = por %p156, %p157
      %p159 = scmp.ne.s32.totalorder %s145, %s146
      %p160 = scmp.eq.s32.totalorder %s21, 3
      %p161 = por %p159, %p160
      %p163 = scmp.ne.s32.totalorder %s146, %s162
      %p164 = scmp.eq.s32.totalorder %s21, 0
      %p165 = por %p163, %p164
      %p166 = scmp.le.s32.totalorder 1, %s15
      %p167 = scmp.lt.s32.totalorder %s15, 5
      %p168 = pnand %p166, %p167
      %p169 = pneg %p168
      // Predicated region
      $region9: #{tpu_custom_call.1} parent=5 // pred_check
        _
      $region10: #{tpu_custom_call.1} parent=5 // pred_check_branch
        %171 = sbr.rel (%p168) target = $region12
      $region11: #{tpu_custom_call.1} parent=5 // pred_region
        %s172 = ssub.s32 %s15, 1
        // Predicated region
        $region13: #{tpu_custom_call.1} parent=11 // pred_check
          %p173 = pneg %p48
        $region14: #{tpu_custom_call.1} parent=11 // pred_check_branch
          %175 = sbr.rel (%p173) target = $region16
        $region15: #{tpu_custom_call.1} parent=11 // pred_region
          %s177 = ssub.s32 32, 32
          %178 = vsyncadd [#allocation5], %s177
          %s180 = sshll.u32 %s0, 4
          %s181 = int_to_ptr.vmem [resolvable:$true] %s180
          %183 = dma.vmem_to_smem %s181, 32, [#allocation3], [#allocation5]
        $region16: #{tpu_custom_call.1} parent=11 // pred_fallthru
          _
      $region12: #{tpu_custom_call.1} parent=5 // pred_fallthru
        _
      %p184 = scmp.lt.s32.totalorder %s15, 4
      // Predicated region
      $region17: #{tpu_custom_call.1} parent=5 // pred_check
        %p185 = pneg %p184
      $region18: #{tpu_custom_call.1} parent=5 // pred_check_branch
        %187 = sbr.rel (%p185) target = $region20
      $region19: #{tpu_custom_call.1} parent=5 // pred_region
        // Predicated region
        $region21: #{tpu_custom_call.1} parent=19 // pred_check
          %p188 = pneg %p70
        $region22: #{tpu_custom_call.1} parent=19 // pred_check_branch
          %190 = sbr.rel (%p188) target = $region24
        $region23: #{tpu_custom_call.1} parent=19 // pred_region
          %s191 = smul.u32 2, %s23
          %p192 = scmp.lt.s32.totalorder %s22, 1
          %s193 = scalar_select %p192, %s22, 1
          %p194 = scmp.lt.s32.totalorder %s191, 3
          %s195 = scalar_select %p194, %s191, 3
          %s196 = smul.addr %s193, 4
          %s197 = sadd.s32 %s195, %s196
          %s198 = smul.addr %s197, 4
          %s199 = scalar_lea.vmem %s1, %s198
          %s200 = smul.u32 2, %s23
        $region24: #{tpu_custom_call.1} parent=19 // pred_fallthru
          _
        // Predicated region
        $region25: #{tpu_custom_call.1} parent=19 // pred_check
          %p201 = pneg %p98
        $region26: #{tpu_custom_call.1} parent=19 // pred_check_branch
          %203 = sbr.rel (%p201) target = $region28
        $region27: #{tpu_custom_call.1} parent=19 // pred_region
          %s204 = smul.u32 2, %s23
          %p205 = scmp.lt.s32.totalorder %s22, 1
          %s206 = scalar_select %p205, %s22, 1
          %p207 = scmp.lt.s32.totalorder %s204, 3
          %s208 = scalar_select %p207, %s204, 3
          %s209 = smul.addr %s206, 4
          %s210 = sadd.s32 %s208, %s209
          %s211 = smul.addr %s210, 4
          %s212 = scalar_lea.vmem %s2, %s211
          %s213 = smul.u32 2, %s23
        $region28: #{tpu_custom_call.1} parent=19 // pred_fallthru
          _
      $region20: #{tpu_custom_call.1} parent=5 // pred_fallthru
        _
      %p214 = scmp.le.s32.totalorder 1, %s15
      %p215 = scmp.lt.s32.totalorder %s15, 5
      %p216 = pnand %p214, %p215
      %p217 = pneg %p216
      // Predicated region
      $region29: #{tpu_custom_call.1} parent=5 // pred_check
        _
      $region30: #{tpu_custom_call.1} parent=5 // pred_check_branch
        %219 = sbr.rel (%p216) target = $region32
      $region31: #{tpu_custom_call.1} parent=5 // pred_region
        %s220 = ssub.s32 %s15, 1
        // Predicated region
        $region33: #{tpu_custom_call.1} parent=31 // pred_check
          %p221 = pneg %p48
        $region34: #{tpu_custom_call.1} parent=31 // pred_check_branch
          %223 = sbr.rel (%p221) target = $region36
        $region35: #{tpu_custom_call.1} parent=31 // pred_region
          %224 = dma.done [#allocation5], 32
        $region36: #{tpu_custom_call.1} parent=31 // pred_fallthru
          _
        %225 = sfence
        %p226 = pneg %p48
        %p227 = pneg %p45
        %s228 = smul.u32 2, %s25
        %p229 = scmp.lt.s32.totalorder %s24, 1
        %s230 = scalar_select %p229, %s24, 1
        %p231 = scmp.lt.s32.totalorder %s228, 3
        %s232 = scalar_select %p231, %s228, 3
        %s233 = smul.addr %s230, 4
        %s234 = sadd.s32 %s232, %s233
        %s235 = smul.addr %s234, 4
        %s236 = scalar_lea.vmem %s1, %s235
        %p237 = pneg %p76
        %p238 = pneg %p73
        %s239 = smul.u32 2, %s25
        %p240 = scmp.lt.s32.totalorder %s24, 1
        %s241 = scalar_select %p240, %s24, 1
        %p242 = scmp.lt.s32.totalorder %s239, 3
        %s243 = scalar_select %p242, %s239, 3
        %s244 = smul.addr %s241, 4
        %s245 = sadd.s32 %s243, %s244
        %s246 = smul.addr %s245, 4
        %s247 = scalar_lea.vmem %s2, %s246
        %p248 = pneg %p104
        %p249 = pneg %p101
        %p250 = pneg %p130
        %p251 = pneg %p127
        %s252 = sand.u32 %s117, 1
        %s253 = scalar_lea.sflag [#allocation4], %s252
        %s254 = sand.u32 %s117, 1
        %s255 = smul.addr %s254, 32
        %s256 = scalar_lea.vmem [#allocation6], %s255
        %p257 = pneg %p158
        %p258 = pneg %p155
        %s259 = smul.u32 2, %s25
        %p260 = scmp.lt.s32.totalorder %s24, 1
        %s261 = scalar_select %p260, %s24, 1
        %p262 = scmp.lt.s32.totalorder %s259, 3
        %s263 = scalar_select %p262, %s259, 3
        %s264 = smul.addr %s261, 4
        %s265 = sadd.s32 %s263, %s264
        %s266 = smul.addr %s265, 4
        %s267 = scalar_lea.vmem %s4, %s266
        %s268 = smul.u32 2, %s25
        %p269 = scmp.lt.s32.totalorder %s24, 1
        %s270 = scalar_select %p269, %s24, 1
        %p271 = scmp.lt.s32.totalorder %s268, 3
        %s272 = scalar_select %p271, %s268, 3
        %s273 = smul.addr %s270, 4
        %s274 = sadd.s32 %s272, %s273
        %s275 = smul.addr %s274, 4
        %s276 = scalar_lea.vmem %s1, %s275
        %s277 = smul.u32 2, %s25
        %s278 = smul.u32 2, %s25
        %p279 = scmp.lt.s32.totalorder %s24, 1
        %s280 = scalar_select %p279, %s24, 1
        %p281 = scmp.lt.s32.totalorder %s278, 3
        %s282 = scalar_select %p281, %s278, 3
        %s283 = smul.addr %s280, 4
        %s284 = sadd.s32 %s282, %s283
        %s285 = smul.addr %s284, 4
        %s286 = scalar_lea.vmem %s2, %s285
        %s287 = smul.u32 2, %s25
        %s288 = smul.u32 2, %s25
        %p289 = scmp.lt.s32.totalorder %s24, 1
        %s290 = scalar_select %p289, %s24, 1
        %p291 = scmp.lt.s32.totalorder %s288, 3
        %s292 = scalar_select %p291, %s288, 3
        %s293 = smul.addr %s290, 4
        %s294 = sadd.s32 %s292, %s293
        %s295 = smul.addr %s294, 4
        %s296 = scalar_lea.vmem %s4, %s295
        %s297 = smul.u32 2, %s25
        %p298 = scmp.eq.s32.totalorder %s25, 0
        // Predicated region
        $region37: #{tpu_custom_call.1} parent=31 // pred_check
          %p299 = pneg %p298
        $region38: #{tpu_custom_call.1} parent=31 // pred_check_branch
          %301 = sbr.rel (%p299) target = $region40
        $region39: #{tpu_custom_call.1} parent=31 // pred_region
          %302 = vst [vmem:[#allocation2] sm:$0xff] 0.0
          %303 = vst [vmem:[#allocation2 + $0x8] sm:$0xff] 0.0
          %304 = vst [vmem:[#allocation2 + $0x10] sm:$0xff] 0.0
          %305 = vst [vmem:[#allocation2 + $0x18] sm:$0xff] 0.0
          %306 = vst [vmem:[#allocation2 + $0x20] sm:$0xff] 0.0
        $region40: #{tpu_custom_call.1} parent=31 // pred_fallthru
          _
        %s307 = smul.u32 %s24, 128
        %s308 = sld [smem:[#allocation3 + %s307]]
        %s309 = sadd.s32 %s307, 1
        %s310 = sld [smem:[#allocation3 + %s309]]
        %s311 = sadd.s32 %s307, 2
        %s312 = sld [smem:[#allocation3 + %s311]]
        %s313 = sadd.s32 %s307, 3
        %s314 = sld [smem:[#allocation3 + %s313]]
        %v315 = vld [vmem:[%s286] sm:$0x77]
        %v316 = vlaneseq
        %v317 = vshrl.u32 %v316, 7
        %vm318 = vcmp.eq.s32.totalorder %v317, 0
        %vm319 = vcmp.eq.s32.totalorder %v317, 1
        %v320 = vstv %s310
        %v321 = vstv %s312
        %v322 = vsel %vm319, %v320, %v321
        %v323 = vstv %s308
        %v324 = vsel %vm318, %v323, %v322
        %v327 = vunpack.c.l.s4 839922192
        %v328 = vunpack.c.0.s8 %v327
        %v329 = vlaneseq
        %v330 = vshrl.u32 %v329, 7
        %v331 = vsub.s32 %v328, %v330
        %v332 = vrot.slane %v324, %v331
        %v334 = vsub.f32 %v315, %v332
        %v335 = vstv %s314
        %v336 = vmul.f32 %v334, %v335
        %v337 = vadd.f32 %v336, 0.5
        %v338 = vmul.f32 %v337, 8.0
        %v339 = vmax.f32 %v338, 0.0
        %v340 = vmin.f32 %v339, 7.0
        %341 = vst [vmem:[%s296] sm:$0x77] %v340
        %v342 = vcvt.f32.s32.ties.to.even %v340
        %v343 = vmul.u32 %v342, 8
        %v344 = vrot.slane %v342, 5
        %v345 = vrot.slane %v344, 4
        %v346 = vadd.s32 %v343, %v345
        %s347 = smul.u32 %s25, 256
        %v348 = vlaneseq
        %v349 = vand.u32 %v348, 127
        %v350 = vadd.s32 %v349, 128
        %v351 = vstv %s347
        %v352 = vadd.s32 %v351, %v349
        %v353 = vadd.s32 %v351, %v350
        %vm354 = vcmp.lt.s32.totalorder %v352, 500
        %vm355 = vcmp.lt.s32.totalorder %v353, 500
        %v356 = vld [vmem:[%s276] sm:$0xff]
        %v357 = vsel %vm354, 1, 0
        %v358 = vsel %vm355, 1, 0
        %vm359 = vcmp.eq.s32.totalorder %v357, 1
        %vm360 = vcmp.eq.s32.totalorder %v358, 1
        %v362 = vcombine.high %v356, %v356
        %v364 = vsel %vm359, %v356, 0.0
        %v365 = vsel %vm360, %v362, 0.0
        %v366 = vcvt.s32.f32 %v357
        %v367 = vcvt.s32.f32 %v358
        %v368 = vlaneseq
        %v369 = vshrl.u32 %v368, 7
        %v370 = vsub.s32 0, %v369
        %v371 = vrot.slane %v342, %v370
        %v372 = vlaneseq
        %v373 = vshrl.u32 %v372, 7
        %v374 = vsub.s32 4, %v373
        %v375 = vrot.slane %v342, %v374
        %v376 = vlaneseq
        %v377 = vshrl.u32 %v376, 7
        %v378 = vsub.s32 0, %v377
        %v379 = vrot.slane %v371, %v378
        %v380 = vlaneseq
        %v381 = vshrl.u32 %v380, 7
        %v382 = vsub.s32 0, %v381
        %v383 = vrot.slane %v375, %v382
        %vm384 = vcmp.eq.s32.totalorder %v317, %v379
        %vm385 = vcmp.eq.s32.totalorder %v317, %v383
        %v386 = vsel %vm384, 1, 0
        %v387 = vsel %vm385, 1, 0
        %v388 = vcvt.s32.f32 %v386
        %v389 = vcvt.s32.f32 %v387
        %v390 = vlaneseq
        %v391 = vshrl.u32 %v390, 7
        %v392 = vsub.s32 0, %v391
        %v393 = vrot.slane %v364, %v392
        %v394 = vlaneseq
        %v395 = vshrl.u32 %v394, 7
        %v396 = vsub.s32 0, %v395
        %v397 = vrot.slane %v365, %v396
        %v398 = vmul.f32 %v393, %v388
        %v399 = vmul.f32 %v397, %v389
        %v400 = vlaneseq
        %v401 = vshrl.u32 %v400, 7
        %v402 = vsub.s32 1, %v401
        %v403 = vrot.slane %v364, %v402
        %v404 = vlaneseq
        %v405 = vshrl.u32 %v404, 7
        %v406 = vsub.s32 1, %v405
        %v407 = vrot.slane %v365, %v406
        %v408 = vmul.f32 %v403, %v388
        %v409 = vmul.f32 %v407, %v389
        %v410 = vlaneseq
        %v411 = vshrl.u32 %v410, 7
        %v412 = vsub.s32 2, %v411
        %v413 = vrot.slane %v364, %v412
        %v414 = vlaneseq
        %v415 = vshrl.u32 %v414, 7
        %v416 = vsub.s32 2, %v415
        %v417 = vrot.slane %v365, %v416
        %v418 = vmul.f32 %v413, %v388
        %v419 = vmul.f32 %v417, %v389
        %v420 = vlaneseq
        %v421 = vshrl.u32 %v420, 7
        %v422 = vsub.s32 3, %v421
        %v423 = vrot.slane %v364, %v422
        %v424 = vlaneseq
        %v425 = vshrl.u32 %v424, 7
        %v426 = vsub.s32 3, %v425
        %v427 = vrot.slane %v365, %v426
        %v428 = vmul.f32 %v423, %v388
        %v429 = vmul.f32 %v427, %v389
        %v430 = vmul.f32 %v366, %v388
        %v431 = vmul.f32 %v367, %v389
        %v432 = vadd.s32 %v317, 8
        %v433 = vadd.s32 %v317, 16
        %v434 = vadd.s32 %v317, 24
        %v435 = vadd.s32 %v317, 32
        %v436 = vadd.s32 %v317, 40
        %v437 = vadd.s32 %v317, 48
        %v438 = vadd.s32 %v317, 56
        %v439 = vadd.s32 %v317, 64
        %v440 = vadd.s32 %v317, 72
        %v441 = vadd.s32 %v317, 80
        %v442 = vadd.s32 %v317, 88
        %v443 = vadd.s32 %v317, 96
        %v444 = vadd.s32 %v317, 104
        %v445 = vadd.s32 %v317, 112
        %v446 = vadd.s32 %v317, 120
        %v447 = vlaneseq
        %v448 = vshrl.u32 %v447, 7
        %v449 = vsub.s32 1, %v448
        %v450 = vrot.slane %v346, %v449
        %v451 = vlaneseq
        %v452 = vshrl.u32 %v451, 7
        %v453 = vsub.s32 5, %v452
        %v454 = vrot.slane %v346, %v453
        %v455 = vlaneseq
        %v456 = vshrl.u32 %v455, 7
        %v457 = vsub.s32 1, %v456
        %v458 = vrot.slane %v450, %v457
        %v459 = vlaneseq
        %v460 = vshrl.u32 %v459, 7
        %v461 = vsub.s32 1, %v460
        %v462 = vrot.slane %v454, %v461
        %vm463 = vcmp.eq.s32.totalorder %v317, %v458
        %vm464 = vcmp.eq.s32.totalorder %v317, %v462
        %vm465 = vcmp.eq.s32.totalorder %v432, %v458
        %vm466 = vcmp.eq.s32.totalorder %v432, %v462
        %vm467 = vcmp.eq.s32.totalorder %v433, %v458
        %vm468 = vcmp.eq.s32.totalorder %v433, %v462
        %vm469 = vcmp.eq.s32.totalorder %v434, %v458
        %vm470 = vcmp.eq.s32.totalorder %v434, %v462
        %vm471 = vcmp.eq.s32.totalorder %v435, %v458
        %vm472 = vcmp.eq.s32.totalorder %v435, %v462
        %vm473 = vcmp.eq.s32.totalorder %v436, %v458
        %vm474 = vcmp.eq.s32.totalorder %v436, %v462
        %vm475 = vcmp.eq.s32.totalorder %v437, %v458
        %vm476 = vcmp.eq.s32.totalorder %v437, %v462
        %vm477 = vcmp.eq.s32.totalorder %v438, %v458
        %vm478 = vcmp.eq.s32.totalorder %v438, %v462
        %vm479 = vcmp.eq.s32.totalorder %v439, %v458
        %vm480 = vcmp.eq.s32.totalorder %v439, %v462
        %vm481 = vcmp.eq.s32.totalorder %v440, %v458
        %vm482 = vcmp.eq.s32.totalorder %v440, %v462
        %vm483 = vcmp.eq.s32.totalorder %v441, %v458
        %vm484 = vcmp.eq.s32.totalorder %v441, %v462
        %vm485 = vcmp.eq.s32.totalorder %v442, %v458
        %vm486 = vcmp.eq.s32.totalorder %v442, %v462
        %vm487 = vcmp.eq.s32.totalorder %v443, %v458
        %vm488 = vcmp.eq.s32.totalorder %v443, %v462
        %vm489 = vcmp.eq.s32.totalorder %v444, %v458
        %vm490 = vcmp.eq.s32.totalorder %v444, %v462
        %vm491 = vcmp.eq.s32.totalorder %v445, %v458
        %vm492 = vcmp.eq.s32.totalorder %v445, %v462
        %vm493 = vcmp.eq.s32.totalorder %v446, %v458
        %vm494 = vcmp.eq.s32.totalorder %v446, %v462
        %v495 = vsel %vm463, 1, 0
        %v496 = vsel %vm464, 1, 0
        %v497 = vsel %vm465, 1, 0
        %v498 = vsel %vm466, 1, 0
        %v499 = vsel %vm467, 1, 0
        %v500 = vsel %vm468, 1, 0
        %v501 = vsel %vm469, 1, 0
        %v502 = vsel %vm470, 1, 0
        %v503 = vsel %vm471, 1, 0
        %v504 = vsel %vm472, 1, 0
        %v505 = vsel %vm473, 1, 0
        %v506 = vsel %vm474, 1, 0
        %v507 = vsel %vm475, 1, 0
        %v508 = vsel %vm476, 1, 0
        %v509 = vsel %vm477, 1, 0
        %v510 = vsel %vm478, 1, 0
        %v511 = vsel %vm479, 1, 0
        %v512 = vsel %vm480, 1, 0
        %v513 = vsel %vm481, 1, 0
        %v514 = vsel %vm482, 1, 0
        %v515 = vsel %vm483, 1, 0
        %v516 = vsel %vm484, 1, 0
        %v517 = vsel %vm485, 1, 0
        %v518 = vsel %vm486, 1, 0
        %v519 = vsel %vm487, 1, 0
        %v520 = vsel %vm488, 1, 0
        %v521 = vsel %vm489, 1, 0
        %v522 = vsel %vm490, 1, 0
        %v523 = vsel %vm491, 1, 0
        %v524 = vsel %vm492, 1, 0
        %v525 = vsel %vm493, 1, 0
        %v526 = vsel %vm494, 1, 0
        %v527 = vcvt.s32.f32 %v495
        %v528 = vcvt.s32.f32 %v496
        %v529 = vcvt.s32.f32 %v497
        %v530 = vcvt.s32.f32 %v498
        %v531 = vcvt.s32.f32 %v499
        %v532 = vcvt.s32.f32 %v500
        %v533 = vcvt.s32.f32 %v501
        %v534 = vcvt.s32.f32 %v502
        %v535 = vcvt.s32.f32 %v503
        %v536 = vcvt.s32.f32 %v504
        %v537 = vcvt.s32.f32 %v505
        %v538 = vcvt.s32.f32 %v506
        %v539 = vcvt.s32.f32 %v507
        %v540 = vcvt.s32.f32 %v508
        %v541 = vcvt.s32.f32 %v509
        %v542 = vcvt.s32.f32 %v510
        %v543 = vcvt.s32.f32 %v511
        %v544 = vcvt.s32.f32 %v512
        %v545 = vcvt.s32.f32 %v513
        %v546 = vcvt.s32.f32 %v514
        %v547 = vcvt.s32.f32 %v515
        %v548 = vcvt.s32.f32 %v516
        %v549 = vcvt.s32.f32 %v517
        %v550 = vcvt.s32.f32 %v518
        %v551 = vcvt.s32.f32 %v519
        %v552 = vcvt.s32.f32 %v520
        %v553 = vcvt.s32.f32 %v521
        %v554 = vcvt.s32.f32 %v522
        %v555 = vcvt.s32.f32 %v523
        %v556 = vcvt.s32.f32 %v524
        %v557 = vcvt.s32.f32 %v525
        %v558 = vcvt.s32.f32 %v526
        %v559 = vld [vmem:[#allocation2] sm:$0xff]
        %v560 = vld [vmem:[#allocation2 + $0x8] sm:$0xff]
        %v561 = vld [vmem:[#allocation2 + $0x10] sm:$0xff]
        %v562 = vld [vmem:[#allocation2 + $0x18] sm:$0xff]
        %v563 = vld [vmem:[#allocation2 + $0x20] sm:$0xff]
        %564 = vmatprep.subr.mxu0 %v528
        %565 = vmatpush1.xpose.msra.mxu0 %v527
        %566 = vmatprep.subr.mxu0 %v530
        %567 = vmatpush1.xpose.msra.mxu0 %v529
        %568 = vmatprep.subr.mxu0 %v532
        %569 = vmatpush1.xpose.msra.mxu0 %v531
        %570 = vmatprep.subr.mxu0 %v534
        %571 = vmatpush1.xpose.msra.mxu0 %v533
        %572 = vmatprep.subr.mxu0 %v536
        %573 = vmatpush1.xpose.msra.mxu0 %v535
        %574 = vmatprep.subr.mxu0 %v538
        %575 = vmatpush1.xpose.msra.mxu0 %v537
        %576 = vmatprep.subr.mxu0 %v540
        %577 = vmatpush1.xpose.msra.mxu0 %v539
        %578 = vmatprep.subr.mxu0 %v542
        %579 = vmatpush1.xpose.msra.mxu0 %v541
        %580 = vmatprep.subr.mxu0 %v544
        %581 = vmatpush1.xpose.msra.mxu0 %v543
        %582 = vmatprep.subr.mxu0 %v546
        %583 = vmatpush1.xpose.msra.mxu0 %v545
        %584 = vmatprep.subr.mxu0 %v548
        %585 = vmatpush1.xpose.msra.mxu0 %v547
        %586 = vmatprep.subr.mxu0 %v550
        %587 = vmatpush1.xpose.msra.mxu0 %v549
        %588 = vmatprep.subr.mxu0 %v552
        %589 = vmatpush1.xpose.msra.mxu0 %v551
        %590 = vmatprep.subr.mxu0 %v554
        %591 = vmatpush1.xpose.msra.mxu0 %v553
        %592 = vmatprep.subr.mxu0 %v556
        %593 = vmatpush1.xpose.msra.mxu0 %v555
        %594 = vmatprep.subr.mxu0 %v558
        %595 = vmatpush1.xpose.msra.mxu0 %v557
        %596 = vmatprep.subr.mxu0 0.0
        %597 = vmatpush1.xpose.msra.mxu0 0.0
        %598 = vmatprep.subr.mxu0 0.0
        %599 = vmatpush1.xpose.msra.mxu0 0.0
        %600 = vmatprep.subr.mxu0 0.0
        %601 = vmatpush1.xpose.msra.mxu0 0.0
        %602 = vmatprep.subr.mxu0 0.0
        %603 = vmatpush1.xpose.msra.mxu0 0.0
        %604 = vmatprep.subr.mxu0 0.0
        %605 = vmatpush1.xpose.msra.mxu0 0.0
        %606 = vmatprep.subr.mxu0 0.0
        %607 = vmatpush1.xpose.msra.mxu0 0.0
        %608 = vmatprep.subr.mxu0 0.0
        %609 = vmatpush1.xpose.msra.mxu0 0.0
        %610 = vmatprep.subr.mxu0 0.0
        %611 = vmatpush1.xpose.msra.mxu0 0.0
        %612 = vmatprep.subr.mxu0 0.0
        %613 = vmatpush1.xpose.msra.mxu0 0.0
        %614 = vmatprep.subr.mxu0 0.0
        %615 = vmatpush1.xpose.msra.mxu0 0.0
        %616 = vmatprep.subr.mxu0 0.0
        %617 = vmatpush1.xpose.msra.mxu0 0.0
        %618 = vmatprep.subr.mxu0 0.0
        %619 = vmatpush1.xpose.msra.mxu0 0.0
        %620 = vmatprep.subr.mxu0 0.0
        %621 = vmatpush1.xpose.msra.mxu0 0.0
        %622 = vmatprep.subr.mxu0 0.0
        %623 = vmatpush1.xpose.msra.mxu0 0.0
        %624 = vmatprep.subr.mxu0 0.0
        %625 = vmatpush1.xpose.msra.mxu0 0.0
        %626 = vmatprep.subr.mxu0 0.0
        %627 = vmatpush1.xpose.msra.mxu0 0.0
        %628 = vmatprep.mubr.f32.mxu0 %v399
        %629 = vmatmul.mubr.f32.gmra.mrb[0].mxu0 %v398
        %v630 = vpop.f32.mrb[0].mxu0
        %v631 = vadd.f32 0.0, %v630
        %v632 = vpop.f32.mrb[0].mxu0
        %633 = vmatprep.mubr.f32.mxu0 %v409
        %634 = vmatmul.mubr.f32.gmra.mrb[0].mxu0 %v408
        %v635 = vpop.f32.mrb[0].mxu0
        %v636 = vadd.f32 0.0, %v635
        %v637 = vpop.f32.mrb[0].mxu0
        %638 = vmatprep.mubr.f32.mxu0 %v419
        %639 = vmatmul.mubr.f32.gmra.mrb[0].mxu0 %v418
        %v640 = vpop.f32.mrb[0].mxu0
        %v641 = vadd.f32 0.0, %v640
        %v642 = vpop.f32.mrb[0].mxu0
        %643 = vmatprep.mubr.f32.mxu0 %v429
        %644 = vmatmul.mubr.f32.gmra.mrb[0].mxu0 %v428
        %v645 = vpop.f32.mrb[0].mxu0
        %v646 = vadd.f32 0.0, %v645
        %v647 = vpop.f32.mrb[0].mxu0
        %648 = vmatprep.mubr.f32.mxu0 %v431
        %649 = vmatmul.mubr.f32.gmra.mrb[0].mxu0 %v430
        %v650 = vpop.f32.mrb[0].mxu0
        %v651 = vadd.f32 0.0, %v650
        %v652 = vpop.f32.mrb[0].mxu0
        %653 = vdwg.mxu0
        %v654 = vadd.f32 %v559, %v631
        %v655 = vadd.f32 %v560, %v636
        %v656 = vadd.f32 %v561, %v641
        %v657 = vadd.f32 %v562, %v646
        %v658 = vadd.f32 %v563, %v651
        %659 = vst [vmem:[#allocation2] sm:$0xff] %v654
        %660 = vst [vmem:[#allocation2 + $0x8] sm:$0xff] %v655
        %661 = vst [vmem:[#allocation2 + $0x10] sm:$0xff] %v656
        %662 = vst [vmem:[#allocation2 + $0x18] sm:$0xff] %v657
        %663 = vst [vmem:[#allocation2 + $0x20] sm:$0xff] %v658
        %p664 = scmp.eq.s32.totalorder %s25, 1
        // Predicated region
        $region41: #{tpu_custom_call.1} parent=31 // pred_check
          %p665 = pneg %p664
        $region42: #{tpu_custom_call.1} parent=31 // pred_check_branch
          %667 = sbr.rel (%p665) target = $region44
        $region43: #{tpu_custom_call.1} parent=31 // pred_region
          %v668 = vld [vmem:[#allocation2] sm:$0xff]
          %v669 = vld [vmem:[#allocation2 + $0x8] sm:$0xff]
          %v670 = vld [vmem:[#allocation2 + $0x10] sm:$0xff]
          %v671 = vld [vmem:[#allocation2 + $0x18] sm:$0xff]
          %v672 = vld [vmem:[#allocation2 + $0x20] sm:$0xff]
          %v673 = vmax.f32 %v672, 1.0
          %v674 = vrcp.pop %v673
          %v675 = vmul.f32 1.0, %v674
          %v676 = vmul.f32 %v668, %v675
          %v677 = vmul.f32 %v669, %v675
          %v678 = vmul.f32 %v670, %v675
          %v679 = vmul.f32 %v671, %v675
          %680 = vst [vmem:[%s256] sm:$0xff] %v676
          %681 = vst [vmem:[%s256 + $0x8] sm:$0xff] %v677
          %682 = vst [vmem:[%s256 + $0x10] sm:$0xff] %v678
          %683 = vst [vmem:[%s256 + $0x18] sm:$0xff] %v679
        $region44: #{tpu_custom_call.1} parent=31 // pred_fallthru
          _
        %s684 = sand.u32 %s117, 1
        %s685 = scalar_lea.sflag [#allocation4], %s684
        %s686 = sand.u32 %s117, 1
        %s687 = smul.addr %s686, 32
        %s688 = scalar_lea.vmem [#allocation6], %s687
        %s689 = smul.u32 2, %s25
        %p690 = scmp.lt.s32.totalorder %s24, 1
        %s691 = scalar_select %p690, %s24, 1
        %p692 = scmp.lt.s32.totalorder %s689, 3
        %s693 = scalar_select %p692, %s689, 3
        %s694 = smul.addr %s691, 4
        %s695 = sadd.s32 %s693, %s694
        %s696 = smul.addr %s695, 4
        %s697 = scalar_lea.vmem %s4, %s696
        // Predicated region
        $region45: #{tpu_custom_call.1} parent=31 // pred_check
          %p698 = pneg %p127
        $region46: #{tpu_custom_call.1} parent=31 // pred_check_branch
          %700 = sbr.rel (%p698) target = $region48
        $region47: #{tpu_custom_call.1} parent=31 // pred_region
          %s702 = ssub.s32 512, 512
          %703 = vsyncadd %s685, %s702
          %s704 = smul.addr %s24, 4
          %s705 = smul.addr %s704, 128
          %s706 = scalar_lea.hbm %s3, %s705
          %s707 = sshll.u32 %s688, 4
          %s708 = int_to_ptr.vmem [resolvable:$true] %s707
          %713 = dma.vmem_to_hbm [thread:$0]  %s708, 512, %s706, %s685, 128, 128, 8
        $region48: #{tpu_custom_call.1} parent=31 // pred_fallthru
          _
        // Predicated region
        $region49: #{tpu_custom_call.1} parent=31 // pred_check
          %p714 = pneg %p155
        $region50: #{tpu_custom_call.1} parent=31 // pred_check_branch
          %716 = sbr.rel (%p714) target = $region52
        $region51: #{tpu_custom_call.1} parent=31 // pred_region
          %s717 = smul.u32 2, %s25
        $region52: #{tpu_custom_call.1} parent=31 // pred_fallthru
          _
      $region32: #{tpu_custom_call.1} parent=5 // pred_fallthru
        _
      %p718 = scmp.le.s32.totalorder 2, %s15
      // Predicated region
      $region53: #{tpu_custom_call.1} parent=5 // pred_check
        %p719 = pneg %p718
      $region54: #{tpu_custom_call.1} parent=5 // pred_check_branch
        %721 = sbr.rel (%p719) target = $region56
      $region55: #{tpu_custom_call.1} parent=5 // pred_region
        %s722 = ssub.s32 %s15, 2
        // Predicated region
        $region57: #{tpu_custom_call.1} parent=55 // pred_check
          %p723 = pneg %p133
        $region58: #{tpu_custom_call.1} parent=55 // pred_check_branch
          %725 = sbr.rel (%p723) target = $region60
        $region59: #{tpu_custom_call.1} parent=55 // pred_region
          %s726 = sand.u32 %s118, 1
          %s727 = scalar_lea.sflag [#allocation4], %s726
          %s728 = sand.u32 %s118, 1
          %s729 = smul.addr %s728, 32
          %s730 = scalar_lea.vmem [#allocation6], %s729
          %731 = dma.done %s727, 512
        $region60: #{tpu_custom_call.1} parent=55 // pred_fallthru
          _
        // Predicated region
        $region61: #{tpu_custom_call.1} parent=55 // pred_check
          %p732 = pneg %p161
        $region62: #{tpu_custom_call.1} parent=55 // pred_check_branch
          %734 = sbr.rel (%p732) target = $region64
        $region63: #{tpu_custom_call.1} parent=55 // pred_region
          %s735 = smul.u32 2, %s27
          %p736 = scmp.lt.s32.totalorder %s26, 1
          %s737 = scalar_select %p736, %s26, 1
          %p738 = scmp.lt.s32.totalorder %s735, 3
          %s739 = scalar_select %p738, %s735, 3
          %s740 = smul.addr %s737, 4
          %s741 = sadd.s32 %s739, %s740
          %s742 = smul.addr %s741, 4
          %s743 = scalar_lea.vmem %s4, %s742
        $region64: #{tpu_custom_call.1} parent=55 // pred_fallthru
          _
      $region56: #{tpu_custom_call.1} parent=5 // pred_fallthru
        _
    $region6: #{tpu_custom_call.1} parent=1 // loop_footer
      %s19 = sadd.s32 1, %s15
    $region7: #{tpu_custom_call.1} parent=1 // loop_footer_branch
      %14 = sbr.rel target = $region3
    $region8: #{tpu_custom_call.1} parent=1 // loop_exit
      _
    %744 = vsyncpa [#allocation4], 1
    %s745 = scalar_lea.sflag [#allocation4], 1
    %746 = vsyncpa %s745, 1
    %747 = vsyncpa [#allocation5], 1
    %s748 = scalar_lea.sflag [#allocation5], 1
    %749 = vsyncpa %s748, 1

</llo_original>
